<compile_context>
chip_gen: v6e
topology: v6e:2x2x1
jax: 0.10.0
libtpu: 0.0.40
codegen_flags: <defaults>
</compile_context>

<pallas_src>
import math
import functools

import jax
import jax.numpy as jnp
from jax import lax
from jax.experimental import pallas as pl
from jax.experimental.pallas import tpu as pltpu


# ---------------------------------------------------------------------------
# Pallas kernel 1: tiled matmul with fused bias (folded BN), optional residual
# add, and optional ReLU epilogue.
# ---------------------------------------------------------------------------
def _mm_kernel(a_ref, b_ref, bias_ref, o_ref, *, apply_relu):
    acc = jnp.dot(a_ref[...], b_ref[...], preferred_element_type=jnp.float32)
    acc = acc + bias_ref[...]
    if apply_relu:
        acc = jnp.maximum(acc, 0.0)
    o_ref[...] = acc


def _mm_res_kernel(a_ref, b_ref, bias_ref, r_ref, o_ref, *, apply_relu):
    acc = jnp.dot(a_ref[...], b_ref[...], preferred_element_type=jnp.float32)
    acc = acc + bias_ref[...] + r_ref[...]
    if apply_relu:
        acc = jnp.maximum(acc, 0.0)
    o_ref[...] = acc


@functools.partial(jax.jit, static_argnames=("relu",))
def pallas_matmul_bias(a, b, bias, residual=None, *, relu=False):
    """(M,K) @ (K,N) + bias[N] (+ residual[M,N]), optional ReLU.  bf16 MXU, f32 out."""
    M, K = a.shape
    _, N = b.shape
    a16 = a.astype(jnp.bfloat16)
    b16 = b.astype(jnp.bfloat16)
    # tm=512 reaches ~85% of HBM roofline on v6e and stays well inside VMEM on v7x.
    tm = 512 if M >= 512 else M

    in_specs = [
        pl.BlockSpec((tm, K), lambda i: (i, 0)),
        pl.BlockSpec((K, N), lambda i: (0, 0)),
        pl.BlockSpec((1, N), lambda i: (0, 0)),
    ]
    args = [a16, b16, bias.reshape(1, N).astype(jnp.float32)]
    if residual is None:
        kernel = functools.partial(_mm_kernel, apply_relu=relu)
    else:
        kernel = functools.partial(_mm_res_kernel, apply_relu=relu)
        in_specs.append(pl.BlockSpec((tm, N), lambda i: (i, 0)))
        args.append(residual.astype(jnp.float32))

    return pl.pallas_call(
        kernel,
        out_shape=jax.ShapeDtypeStruct((M, N), jnp.float32),
        grid=(pl.cdiv(M, tm),),
        in_specs=in_specs,
        out_specs=pl.BlockSpec((tm, N), lambda i: (i, 0)),
        compiler_params=pltpu.CompilerParams(dimension_semantics=("parallel",)),
    )(*args)


# ---------------------------------------------------------------------------
# Conv / deconv / pooling glue (NHWC, im2col in JAX, matmul+BN+ReLU in Pallas)
# ---------------------------------------------------------------------------
def _fold_bn(w_mat, bias, bn, cout, eps=1e-5):
    """Fold inference BatchNorm into the (K, Cout) weight matrix and the bias vector."""
    if bias is None:
        bias = jnp.zeros((cout,), jnp.float32)
    if bn is None:
        return w_mat, bias
    s = bn["w"] * lax.rsqrt(bn["v"] + eps)
    return w_mat * s[None, :], (bias - bn["m"]) * s + bn["b"]


def conv2d(x, w, b=None, *, stride=1, padding=0, dilation=1, bn=None, relu=False,
           residual=None):
    """NHWC conv.  x: (N,H,W,Cin), w: (Cout,Cin,kh,kw) -> (N,Ho,Wo,Cout)."""
    N, H, W, Cin = x.shape
    Cout, _, kh, kw = w.shape
    s, p, d = stride, padding, dilation
    Ho = (H + 2 * p - d * (kh - 1) - 1) // s + 1
    Wo = (W + 2 * p - d * (kw - 1) - 1) // s + 1
    xb = x.astype(jnp.bfloat16)   # build the patch matrix directly in bf16 (half HBM)
    if kh == 1 and kw == 1 and p == 0:
        xs = xb if s == 1 else xb[:, ::s, ::s, :]
        a = xs.reshape(N * Ho * Wo, Cin)
        w_mat = w.reshape(Cout, Cin).T
    else:
        # TODO(synk): fuse im2col into the matmul kernel (DMA shifted row slices per
        # K-block) instead of materializing the kh*kw-inflated patch matrix in HBM.
        xp = jnp.pad(xb, ((0, 0), (p, p), (p, p), (0, 0)))
        patches = []
        for i in range(kh):
            for j in range(kw):
                patches.append(
                    xp[:, i * d: i * d + (Ho - 1) * s + 1: s,
                          j * d: j * d + (Wo - 1) * s + 1: s, :])
        a = jnp.concatenate(patches, axis=-1).reshape(N * Ho * Wo, kh * kw * Cin)
        w_mat = w.transpose(2, 3, 1, 0).reshape(kh * kw * Cin, Cout)
    w_mat, bias = _fold_bn(w_mat, b, bn, Cout)
    res = None if residual is None else residual.reshape(-1, Cout)
    out = pallas_matmul_bias(a, w_mat, bias, res, relu=relu)
    return out.reshape(N, Ho, Wo, Cout)


def conv_transpose2d(x, w, b=None, *, stride=2, padding=1, output_padding=1,
                     bn=None, relu=False):
    """PyTorch ConvTranspose2d in NHWC.  w: (Cin, Cout, kh, kw)."""
    # TODO(synk): decompose stride-2 deconv into sub-pixel convs to skip the zero rows.
    N, H, W, Cin = x.shape
    _, Cout, kh, kw = w.shape
    s, p, op = stride, padding, output_padding
    xb = x.astype(jnp.bfloat16)
    Hz, Wz = (H - 1) * s + 1, (W - 1) * s + 1
    xz = jnp.zeros((N, Hz, Wz, Cin), xb.dtype).at[:, ::s, ::s, :].set(xb)
    xzp = jnp.pad(xz, ((0, 0),
                       (kh - 1 - p, kh - 1 - p + op),
                       (kw - 1 - p, kw - 1 - p + op),
                       (0, 0)))
    w_conv = jnp.flip(w, axis=(2, 3)).transpose(1, 0, 2, 3)   # (Cout, Cin, kh, kw)
    return conv2d(xzp, w_conv, b, stride=1, padding=0, bn=bn, relu=relu)


def maxpool3x3s2(x):
    return lax.reduce_window(
        x, -jnp.inf, lax.max,
        (1, 3, 3, 1), (1, 2, 2, 1),
        ((0, 0), (1, 1), (1, 1), (0, 0)))


# ---------------------------------------------------------------------------
# Pallas kernel 2: criss-cross attention core (CCAttention.forward hot path)
# ---------------------------------------------------------------------------
def _softplus(x):
    # log(1 + exp(x)), numerically stable (matches F.softplus semantics)
    return jnp.maximum(x, 0.0) + jnp.log(1.0 + jnp.exp(-jnp.abs(x)))


def _cca_kernel(q_ref, k_ref, kT_ref, v_ref, vT_ref, x_ref, gamma_ref, o_ref):
    # grid = (batch, row h): criss-cross attention for one image row per step.
    q2 = q_ref[0, 0]        # (W, C8)    softplus(Q) of row h
    k2 = k_ref[0, 0]        # (W, C8)    softplus(K) of row h       (row / W-path)
    kT = kT_ref[0]          # (W, H, C8) softplus(K) of each column (col / H-path)
    v2 = v_ref[0, 0]        # (W, C)
    vT = vT_ref[0]          # (W, H, C)
    x2 = x_ref[0, 0]        # (W, C)
    gamma = gamma_ref[0]
    h = pl.program_id(1)

    # --- energies (MXU contractions over the channel axis) ---
    # column direction: e_col[w, g] = sum_c Q[h,w,c] * K[g,w,c]
    e_col = jnp.einsum('wuc,wgc->wug', q2[:, None, :], kT,
                       preferred_element_type=jnp.float32)[:, 0, :]      # (W, H)
    g_ids = lax.broadcasted_iota(jnp.int32, e_col.shape, 1)
    e_col = jnp.where(g_ids == h, -jnp.inf, e_col)                       # -inf diagonal
    # row direction: e_row[w, v] = sum_c Q[h,w,c] * K[h,v,c]
    e_row = jnp.einsum('wc,vc->wv', q2, k2,
                       preferred_element_type=jnp.float32)               # (W, W)

    # --- joint softmax over the concatenated [H | W] criss-cross axis ---
    m = jnp.maximum(jnp.max(e_col, axis=-1, keepdims=True),
                    jnp.max(e_row, axis=-1, keepdims=True))
    p_col = jnp.exp(e_col - m)
    p_row = jnp.exp(e_row - m)
    inv = pl.reciprocal(jnp.sum(p_col, axis=-1, keepdims=True)
                        + jnp.sum(p_row, axis=-1, keepdims=True), approx=True)

    # --- attention-weighted aggregations (MXU), normalize once at the end ---
    out_col = jnp.einsum('wug,wgc->wuc', p_col[:, None, :], vT,
                         preferred_element_type=jnp.float32)[:, 0, :]    # (W, C)
    out_row = jnp.dot(p_row, v2, preferred_element_type=jnp.float32)     # (W, C)

    o_ref[0, 0] = gamma * ((out_col + out_row) * inv) + x2


@jax.jit
def _cca_pallas(q, k, kT, v, vT, x, gamma):
    B, H, W, C8 = q.shape
    C = v.shape[-1]
    return pl.pallas_call(
        _cca_kernel,
        out_shape=jax.ShapeDtypeStruct((B, H, W, C), jnp.float32),
        grid=(B, H),
        in_specs=[
            pl.BlockSpec((1, 1, W, C8), lambda b, h: (b, h, 0, 0)),   # q row
            pl.BlockSpec((1, 1, W, C8), lambda b, h: (b, h, 0, 0)),   # k row
            pl.BlockSpec((1, W, H, C8), lambda b, h: (b, 0, 0, 0)),   # k columns (resident)
            pl.BlockSpec((1, 1, W, C), lambda b, h: (b, h, 0, 0)),    # v row
            pl.BlockSpec((1, W, H, C), lambda b, h: (b, 0, 0, 0)),    # v columns (resident)
            pl.BlockSpec((1, 1, W, C), lambda b, h: (b, h, 0, 0)),    # residual x row
            pl.BlockSpec(memory_space=pltpu.MemorySpace.SMEM),        # gamma
        ],
        out_specs=pl.BlockSpec((1, 1, W, C), lambda b, h: (b, h, 0, 0)),
        compiler_params=pltpu.CompilerParams(
            dimension_semantics=("parallel", "arbitrary")),
    )(q, k, kT, v, vT, x, gamma)


def cc_attention(x, p):
    """x: (B, H, W, C) NHWC."""
    B, H, W, C = x.shape
    C8 = p["q"]["w"].shape[0]
    # fused q|k|v 1x1 convolutions: one matmul over the shared input (concatenated N)
    wq = p["q"]["w"].reshape(C8, C).T
    wk = p["k"]["w"].reshape(C8, C).T
    wv = p["v"]["w"].reshape(C, C).T
    w_all = jnp.concatenate([wq, wk, wv], axis=1)                  # (C, 2*C8 + C)
    b_all = jnp.concatenate([p["q"]["b"], p["k"]["b"], p["v"]["b"]])
    qkv = pallas_matmul_bias(x.reshape(B * H * W, C), w_all, b_all)
    qkv = qkv.reshape(B, H, W, 2 * C8 + C)
    q = _softplus(qkv[..., :C8])           # softplus applied once (fused by XLA with
    k = _softplus(qkv[..., C8:2 * C8])     # the transposes below), not per-row in-kernel
    v = qkv[..., 2 * C8:]
    kT = jnp.transpose(k, (0, 2, 1, 3))                            # (B, W, H, C8)
    vT = jnp.transpose(v, (0, 2, 1, 3))                            # (B, W, H, C)
    return _cca_pallas(q, k, kT, v, vT, x, p["gamma"])


# ---------------------------------------------------------------------------
# Parameter init (deterministic, shapes per the module __init__)
# ---------------------------------------------------------------------------
class _Rng:
    def __init__(self, key):
        self._key = key

    def normal(self, shape, scale):
        self._key, sub = jax.random.split(self._key)
        return scale * jax.random.normal(sub, shape, jnp.float32)


def init_bn(c):
    return dict(w=jnp.ones((c,), jnp.float32), b=jnp.zeros((c,), jnp.float32),
                m=jnp.zeros((c,), jnp.float32), v=jnp.ones((c,), jnp.float32))


def init_conv(rng, cout, cin, k, bias):
    d = dict(w=rng.normal((cout, cin, k, k), 1.0 / math.sqrt(cin * k * k)))
    if bias:
        d["b"] = jnp.zeros((cout,), jnp.float32)
    return d


def init_deconv(rng, cin, cout, k):
    return dict(w=rng.normal((cin, cout, k, k), 1.0 / math.sqrt(cin * k * k)),
                b=jnp.zeros((cout,), jnp.float32))


def init_cca(rng, dim):
    d8 = dim // 8
    return dict(q=init_conv(rng, d8, dim, 1, True),
                k=init_conv(rng, d8, dim, 1, True),
                v=init_conv(rng, dim, dim, 1, True),
                gamma=jnp.array([0.1], jnp.float32))


def init_rcca(rng, cin, cout):
    inter = cin // 4
    return dict(
        conva=dict(conv=init_conv(rng, inter, cin, 3, False), bn=init_bn(inter)),
        cca=init_cca(rng, inter),
        convb=dict(conv=init_conv(rng, inter, inter, 3, False), bn=init_bn(inter)),
        bottle0=dict(conv=init_conv(rng, cout, cin + inter, 3, False), bn=init_bn(cout)),
        bottle1=init_conv(rng, cout, cout, 1, True))


def init_decoder(rng, cin, nf):
    c4 = cin // 4
    return dict(conv1=init_conv(rng, c4, cin, 1, True), bn1=init_bn(c4),
                deconv2=init_deconv(rng, c4, c4, 3), bn2=init_bn(c4),
                conv3=init_conv(rng, nf, c4, 1, True), bn3=init_bn(nf))


def init_bottleneck(rng, cin, planes, stride):
    p = dict(stride=stride,
             conv1=init_conv(rng, planes, cin, 1, False), bn1=init_bn(planes),
             conv2=init_conv(rng, planes, planes, 3, False), bn2=init_bn(planes),
             conv3=init_conv(rng, planes * 4, planes, 1, False), bn3=init_bn(planes * 4))
    if stride != 1 or cin != planes * 4:
        p["down"] = dict(conv=init_conv(rng, planes * 4, cin, 1, False),
                         bn=init_bn(planes * 4))
    return p


def init_layer(rng, cin, planes, blocks, stride):
    layer = [init_bottleneck(rng, cin, planes, stride)]
    for _ in range(blocks - 1):
        layer.append(init_bottleneck(rng, planes * 4, planes, 1))
    return layer


def init_manet(key, num_classes=5, base=8):
    rng = _Rng(key)
    filters = [base * 4, base * 8, base * 16, base * 32]
    return dict(
        filters=filters,
        firstconv=init_conv(rng, base, 3, 7, False), firstbn=init_bn(base),
        layer1=init_layer(rng, base, base, 3, 1),
        layer2=init_layer(rng, base * 4, base * 2, 4, 2),
        layer3=init_layer(rng, base * 8, base * 4, 6, 2),
        layer4=init_layer(rng, base * 16, base * 8, 3, 2),
        att4=init_rcca(rng, filters[3], filters[3]),
        att3=init_rcca(rng, filters[2], filters[2]),
        att2=init_rcca(rng, filters[1], filters[1]),
        att1=init_rcca(rng, filters[0], filters[0]),
        dec4=init_decoder(rng, filters[3], filters[2]),
        dec3=init_decoder(rng, filters[2], filters[1]),
        dec2=init_decoder(rng, filters[1], filters[0]),
        dec1=init_decoder(rng, filters[0], filters[0]),
        finaldeconv1=init_deconv(rng, filters[0], 32, 4),
        finalconv2=init_conv(rng, 32, 32, 3, True),
        finalconv3=init_conv(rng, num_classes, 32, 3, True))


# ---------------------------------------------------------------------------
# Forward passes (NHWC internally)
# ---------------------------------------------------------------------------
def bottleneck_fwd(x, p):
    idn = x
    out = conv2d(x, p["conv1"]["w"], bn=p["bn1"], relu=True)
    out = conv2d(out, p["conv2"]["w"], stride=p["stride"], padding=1,
                 bn=p["bn2"], relu=True)
    if "down" in p:
        idn = conv2d(x, p["down"]["conv"]["w"], stride=p["stride"],
                     bn=p["down"]["bn"], relu=False)
    # residual add + ReLU fused into the conv3 matmul epilogue (one fewer HBM pass)
    return conv2d(out, p["conv3"]["w"], bn=p["bn3"], relu=True, residual=idn)


def layer_fwd(x, layer):
    for blk in layer:
        x = bottleneck_fwd(x, blk)
    return x


def decoder_fwd(x, p):
    x = conv2d(x, p["conv1"]["w"], p["conv1"]["b"], bn=p["bn1"], relu=True)
    x = conv_transpose2d(x, p["deconv2"]["w"], p["deconv2"]["b"],
                         stride=2, padding=1, output_padding=1,
                         bn=p["bn2"], relu=True)
    x = conv2d(x, p["conv3"]["w"], p["conv3"]["b"], bn=p["bn3"], relu=True)
    return x


def rcca_fwd(x, p, recurrence=1, residual=None):
    out = conv2d(x, p["conva"]["conv"]["w"], padding=1, bn=p["conva"]["bn"], relu=True)
    for _ in range(recurrence):
        out = cc_attention(out, p["cca"])
    out = conv2d(out, p["convb"]["conv"]["w"], padding=1, bn=p["convb"]["bn"], relu=True)
    cat = jnp.concatenate([x, out], axis=-1)
    out = conv2d(cat, p["bottle0"]["conv"]["w"], padding=1,
                 bn=p["bottle0"]["bn"], relu=True)
    # Dropout2d(0.1): inference mode -> identity.
    # The decoder-branch skip add (d_i = decoder(...) + attention(...)) is fused here.
    return conv2d(out, p["bottle1"]["w"], p["bottle1"]["b"], residual=residual)


def manet_forward(p, x):
    x = jnp.transpose(x, (0, 2, 3, 1))                           # NCHW -> NHWC
    x1 = conv2d(x, p["firstconv"]["w"], stride=2, padding=3,
                bn=p["firstbn"], relu=True)
    x1 = maxpool3x3s2(x1)
    e1 = layer_fwd(x1, p["layer1"])
    e2 = layer_fwd(e1, p["layer2"])
    e3 = layer_fwd(e2, p["layer3"])
    e4 = layer_fwd(e3, p["layer4"])
    e4 = rcca_fwd(e4, p["att4"])
    d4 = rcca_fwd(e3, p["att3"], residual=decoder_fwd(e4, p["dec4"]))
    d3 = rcca_fwd(e2, p["att2"], residual=decoder_fwd(d4, p["dec3"]))
    d2 = rcca_fwd(e1, p["att1"], residual=decoder_fwd(d3, p["dec2"]))
    d1 = decoder_fwd(d2, p["dec1"])
    out = conv_transpose2d(d1, p["finaldeconv1"]["w"], p["finaldeconv1"]["b"],
                           stride=2, padding=1, output_padding=0, relu=True)
    out = conv2d(out, p["finalconv2"]["w"], p["finalconv2"]["b"],
                 padding=1, relu=True)
    out = conv2d(out, p["finalconv3"]["w"], p["finalconv3"]["b"], padding=1)
    return jnp.transpose(out, (0, 3, 1, 2))                      # NHWC -> NCHW


# ---------------------------------------------------------------------------
if __name__ == "__main__":
    key = jax.random.PRNGKey(0)
    pkey, xkey = jax.random.split(key)
    num_classes = 5
    params = init_manet(pkey, num_classes=num_classes, base=8)

    x = jax.random.normal(xkey, (2, 3, 64, 64), jnp.float32)     # NCHW, like PyTorch
    # jit the whole forward with params as closure constants so all the plain-JAX glue
    # (im2col, BN folding, transposes, skip concat) is fused around the Pallas calls.
    fwd = jax.jit(functools.partial(manet_forward, params))
    out = jax.block_until_ready(fwd(x))

    assert out.shape == (2, num_classes, 64, 64), out.shape
    assert bool(jnp.all(jnp.isfinite(out)))
    print("KERNEL_OK")
</pallas_src>

<mosaic_0001>
module attributes {stable_mosaic.version = 11 : i64} {
  func.func @_mm_kernel(%arg0: i32, %arg1: memref<512x147xbf16, #tpu.memory_space<vmem>>, %arg2: memref<147x8xbf16, #tpu.memory_space<vmem>>, %arg3: memref<1x8xf32, #tpu.memory_space<vmem>>, %arg4: memref<512x8xf32, #tpu.memory_space<vmem>>) attributes {dimension_semantics = [#tpu.dimension_semantics<parallel>], iteration_bounds = array<i64: 4>, scalar_prefetch = 0 : i64, scratch_operands = 0 : i64, tpu.core_type = #tpu.core_type<tc>, window_params = [{transform_indices = @transform_0, window_bounds = array<i64: 512, 147>}, {pipeline_mode = #tpu.pipeline_mode<synchronous>, transform_indices = @transform_1, window_bounds = array<i64: 147, 8>}, {pipeline_mode = #tpu.pipeline_mode<synchronous>, transform_indices = @transform_2, window_bounds = array<i64: 1, 8>}, {transform_indices = @transform_3, window_bounds = array<i64: 512, 8>}]} {
    %c0 = arith.constant 0 : index
    %c0_0 = arith.constant 0 : index
    %0 = vector.load %arg1[%c0, %c0_0] : memref<512x147xbf16, #tpu.memory_space<vmem>>, vector<512x147xbf16>
    %c0_1 = arith.constant 0 : index
    %c0_2 = arith.constant 0 : index
    %1 = vector.load %arg2[%c0_1, %c0_2] : memref<147x8xbf16, #tpu.memory_space<vmem>>, vector<147x8xbf16>
    %cst = arith.constant dense<0.000000e+00> : vector<512x8xf32>
    %2 = tpu.matmul %0, %1, %cst {dimension_numbers = #tpu.dot_dimension_numbers<[1], [0], [0], [1], [0, 0, 1, 1], [], []>} : vector<512x147xbf16>, vector<147x8xbf16>, vector<512x8xf32> -> vector<512x8xf32>
    %c0_3 = arith.constant 0 : index
    %c0_4 = arith.constant 0 : index
    %3 = vector.load %arg3[%c0_3, %c0_4] : memref<1x8xf32, #tpu.memory_space<vmem>>, vector<1x8xf32>
    %4 = vector.broadcast %3 : vector<1x8xf32> to vector<512x8xf32>
    %5 = arith.addf %2, %4 : vector<512x8xf32>
    %cst_5 = arith.constant 0.000000e+00 : f32
    %6 = vector.broadcast %cst_5 : f32 to vector<512x8xf32>
    %7 = arith.maximumf %5, %6 : vector<512x8xf32>
    %c0_6 = arith.constant 0 : index
    %c0_7 = arith.constant 0 : index
    %8 = vector.load %arg4[%c0_6, %c0_7] : memref<512x8xf32, #tpu.memory_space<vmem>>, vector<512x8xf32>
    tpu.vector_store %arg4[%c0_6, %c0_7], %7 {strides = array<i32>} : memref<512x8xf32, #tpu.memory_space<vmem>>, vector<512x8xf32>,
    return
  }
  func.func @transform_0(%arg0: i32) -> (i32, i32) {
    %c0_i32 = arith.constant 0 : i32
    %c0_i32_0 = arith.constant 0 : i32
    return %arg0, %c0_i32 : i32, i32
  }
  func.func @transform_1(%arg0: i32) -> (i32, i32) {
    %c0_i32 = arith.constant 0 : i32
    %c0_i32_0 = arith.constant 0 : i32
    %c0_i32_1 = arith.constant 0 : i32
    return %c0_i32, %c0_i32_0 : i32, i32
  }
  func.func @transform_2(%arg0: i32) -> (i32, i32) {
    %c0_i32 = arith.constant 0 : i32
    %c0_i32_0 = arith.constant 0 : i32
    %c0_i32_1 = arith.constant 0 : i32
    return %c0_i32, %c0_i32_0 : i32, i32
  }
  func.func @transform_3(%arg0: i32) -> (i32, i32) {
    %c0_i32 = arith.constant 0 : i32
    %c0_i32_0 = arith.constant 0 : i32
    return %arg0, %c0_i32 : i32, i32
  }
}

</mosaic_0001>

<llo_original>
// kernel: pallas_matmul_bias.1
$region0: #{pallas_matmul_bias.1}
  #allocation0 [shape = 'u32[]', space=smem, size = 0x4, offset = 0x4, fixed_abs, tag = 'smem constant byte address 0x4 - core index']
  #allocation1 [shape = 'u32[144,128]{1,0:T(1,128)}', space=vmem, size = 0x12000, scoped, tag = 'internal scratch']
  %s0 = inlined_call_operand.vmem [shape: bf16[2048,147], index: 0, kind: input, shape index: {}]
  %s1 = inlined_call_operand.vmem [shape: bf16[147,8], index: 1, kind: input, shape index: {}]
  %s2 = inlined_call_operand.vmem [shape: f32[1,8], index: 2, kind: input, shape index: {}]
  %s3 = inlined_call_operand.vmem [shape: f32[2048,8], index: 3, kind: output, shape index: {}]
  %s4 = sld [smem:[#allocation0]]
  $region45: #{pallas_matmul_bias.1} parent=0
    _
  %s6 = ssub.s32 1, %s4
  %s7 = scalar_select 0, %s6, %s4
  loop: start=0, step=1, limit=6
  $region2: #{pallas_matmul_bias.1} parent=0 // loop_pre_header
    _
  $region3: #{pallas_matmul_bias.1} parent=0 // loop_header
    %s9 = sphi 0, %s13
    %p10 = scmp.ge.s32.totalorder %s9, 6
    %s19 = sphi 0, %s21
    %s22 = sphi 0, %s19
    %s23 = sphi 0, %s22
    %s39 = sphi 0, %s23
    %s43 = sphi 0, %s43
    %s45 = sphi 0, %s43
    %s46 = sphi 0, %s45
    %s60 = sphi 0, %s46
    %s64 = sphi 0, %s64
    %s66 = sphi 0, %s64
    %s67 = sphi 0, %s66
    %s81 = sphi 0, %s67
    %s87 = sphi 0, %s89
    %s90 = sphi 0, %s87
    %s91 = sphi 0, %s90
    %s107 = sphi 0, %s91
  $region4: #{pallas_matmul_bias.1} parent=0 // loop_header_branch
    %12 = sbr.rel (%p10) target = $region8
  $region5: #{pallas_matmul_bias.1} parent=0 // loop_body
    %s14 = ssub.s32 %s9, 1
    %s15 = ssub.s32 %s9, 2
    %s16 = sadd.s32 %s9, 1
    %s17 = ssub.s32 %s9, %s16
    %p18 = scmp.eq.s32.totalorder %s17, 0
    %s20 = sadd.s32 %s19, 1
    %s21 = scalar_select %p18, %s19, %s20
    %p24 = pneg %p18
    %p25 = scmp.eq.s32.totalorder %s9, 3
    %p26 = por %p24, %p25
    %p27 = scmp.ne.s32.totalorder %s19, %s22
    %p28 = scmp.eq.s32.totalorder %s9, 0
    %p29 = por %p27, %p28
    %p30 = scmp.ne.s32.totalorder %s19, %s22
    %p31 = scmp.eq.s32.totalorder %s14, 3
    %p32 = por %p30, %p31
    %p33 = scmp.ne.s32.totalorder %s22, %s23
    %p34 = scmp.eq.s32.totalorder %s14, 0
    %p35 = por %p33, %p34
    %p36 = scmp.ne.s32.totalorder %s22, %s23
    %p37 = scmp.eq.s32.totalorder %s15, 3
    %p38 = por %p36, %p37
    %p40 = scmp.ne.s32.totalorder %s23, %s39
    %p41 = scmp.eq.s32.totalorder %s15, 0
    %p42 = por %p40, %p41
    %s44 = sadd.s32 %s43, 1
    %p47 = scmp.eq.s32.totalorder %s9, 3
    %p48 = scmp.ne.s32.totalorder %s43, %s45
    %p49 = scmp.eq.s32.totalorder %s9, 0
    %p50 = por %p48, %p49
    %p51 = scmp.ne.s32.totalorder %s43, %s45
    %p52 = scmp.eq.s32.totalorder %s14, 3
    %p53 = por %p51, %p52
    %p54 = scmp.ne.s32.totalorder %s45, %s46
    %p55 = scmp.eq.s32.totalorder %s14, 0
    %p56 = por %p54, %p55
    %p57 = scmp.ne.s32.totalorder %s45, %s46
    %p58 = scmp.eq.s32.totalorder %s15, 3
    %p59 = por %p57, %p58
    %p61 = scmp.ne.s32.totalorder %s46, %s60
    %p62 = scmp.eq.s32.totalorder %s15, 0
    %p63 = por %p61, %p62
    %s65 = sadd.s32 %s64, 1
    %p68 = scmp.eq.s32.totalorder %s9, 3
    %p69 = scmp.ne.s32.totalorder %s64, %s66
    %p70 = scmp.eq.s32.totalorder %s9, 0
    %p71 = por %p69, %p70
    %p72 = scmp.ne.s32.totalorder %s64, %s66
    %p73 = scmp.eq.s32.totalorder %s14, 3
    %p74 = por %p72, %p73
    %p75 = scmp.ne.s32.totalorder %s66, %s67
    %p76 = scmp.eq.s32.totalorder %s14, 0
    %p77 = por %p75, %p76
    %p78 = scmp.ne.s32.totalorder %s66, %s67
    %p79 = scmp.eq.s32.totalorder %s15, 3
    %p80 = por %p78, %p79
    %p82 = scmp.ne.s32.totalorder %s67, %s81
    %p83 = scmp.eq.s32.totalorder %s15, 0
    %p84 = por %p82, %p83
    %s85 = ssub.s32 %s9, %s16
    %p86 = scmp.eq.s32.totalorder %s85, 0
    %s88 = sadd.s32 %s87, 1
    %s89 = scalar_select %p86, %s87, %s88
    %p92 = pneg %p86
    %p93 = scmp.eq.s32.totalorder %s9, 3
    %p94 = por %p92, %p93
    %p95 = scmp.ne.s32.totalorder %s87, %s90
    %p96 = scmp.eq.s32.totalorder %s9, 0
    %p97 = por %p95, %p96
    %p98 = scmp.ne.s32.totalorder %s87, %s90
    %p99 = scmp.eq.s32.totalorder %s14, 3
    %p100 = por %p98, %p99
    %p101 = scmp.ne.s32.totalorder %s90, %s91
    %p102 = scmp.eq.s32.totalorder %s14, 0
    %p103 = por %p101, %p102
    %p104 = scmp.ne.s32.totalorder %s90, %s91
    %p105 = scmp.eq.s32.totalorder %s15, 3
    %p106 = por %p104, %p105
    %p108 = scmp.ne.s32.totalorder %s91, %s107
    %p109 = scmp.eq.s32.totalorder %s15, 0
    %p110 = por %p108, %p109
    %p111 = scmp.le.s32.totalorder 1, %s9
    %p112 = scmp.lt.s32.totalorder %s9, 5
    %p113 = pnand %p111, %p112
    %p114 = pneg %p113
    // Predicated region
    $region9: #{pallas_matmul_bias.1} parent=5 // pred_check
      _
    $region10: #{pallas_matmul_bias.1} parent=5 // pred_check_branch
      %116 = sbr.rel (%p113) target = $region12
    $region11: #{pallas_matmul_bias.1} parent=5 // pred_region
      %s117 = ssub.s32 %s9, 1
      // Predicated region
      $region13: #{pallas_matmul_bias.1} parent=11 // pred_check
        %p118 = pneg %p56
      $region14: #{pallas_matmul_bias.1} parent=11 // pred_check_branch
        %120 = sbr.rel (%p118) target = $region16
      $region15: #{pallas_matmul_bias.1} parent=11 // pred_region
        _
      $region16: #{pallas_matmul_bias.1} parent=11 // pred_fallthru
        _
      // Predicated region
      $region17: #{pallas_matmul_bias.1} parent=11 // pred_check
        %p121 = pneg %p77
      $region18: #{pallas_matmul_bias.1} parent=11 // pred_check_branch
        %123 = sbr.rel (%p121) target = $region20
      $region19: #{pallas_matmul_bias.1} parent=11 // pred_region
        _
      $region20: #{pallas_matmul_bias.1} parent=11 // pred_fallthru
        _
    $region12: #{pallas_matmul_bias.1} parent=5 // pred_fallthru
      _
    %p124 = scmp.lt.s32.totalorder %s9, 4
    // Predicated region
    $region21: #{pallas_matmul_bias.1} parent=5 // pred_check
      %p125 = pneg %p124
    $region22: #{pallas_matmul_bias.1} parent=5 // pred_check_branch
      %127 = sbr.rel (%p125) target = $region24
    $region23: #{pallas_matmul_bias.1} parent=5 // pred_region
      // Predicated region
      $region25: #{pallas_matmul_bias.1} parent=23 // pred_check
        %p128 = pneg %p29
      $region26: #{pallas_matmul_bias.1} parent=23 // pred_check_branch
        %130 = sbr.rel (%p128) target = $region28
      $region27: #{pallas_matmul_bias.1} parent=23 // pred_region
        %s131 = smul.u32 64, %s9
        %p132 = scmp.lt.s32.totalorder %s131, 255
        %s133 = scalar_select %p132, %s131, 255
        %s134 = smul.addr %s133, 2
        %s135 = smul.addr %s134, 4
        %s136 = scalar_lea.vmem %s0, %s135
        %s137 = smul.u32 64, %s9
      $region28: #{pallas_matmul_bias.1} parent=23 // pred_fallthru
        _
    $region24: #{pallas_matmul_bias.1} parent=5 // pred_fallthru
      _
    %p138 = scmp.le.s32.totalorder 1, %s9
    %p139 = scmp.lt.s32.totalorder %s9, 5
    %p140 = pnand %p138, %p139
    %p141 = pneg %p140
    // Predicated region
    $region29: #{pallas_matmul_bias.1} parent=5 // pred_check
      _
    $region30: #{pallas_matmul_bias.1} parent=5 // pred_check_branch
      %143 = sbr.rel (%p140) target = $region32
    $region31: #{pallas_matmul_bias.1} parent=5 // pred_region
      %s144 = ssub.s32 %s9, 1
      %s145 = smul.u32 64, %s14
      %p146 = scmp.lt.s32.totalorder %s145, 255
      %s147 = scalar_select %p146, %s145, 255
      %s148 = smul.addr %s147, 2
      %s149 = smul.addr %s148, 4
      %s150 = scalar_lea.vmem %s0, %s149
      %p151 = pneg %p35
      %p152 = pneg %p32
      %p153 = pneg %p56
      %p154 = pneg %p53
      %p155 = pneg %p77
      %p156 = pneg %p74
      %p157 = pneg %p103
      %p158 = pneg %p100
      %s159 = smul.u32 64, %s14
      %p160 = scmp.lt.s32.totalorder %s159, 255
      %s161 = scalar_select %p160, %s159, 255
      %s162 = smul.addr %s161, 8
      %s163 = scalar_lea.vmem %s3, %s162
      %s164 = smul.u32 64, %s14
      %p165 = scmp.lt.s32.totalorder %s164, 255
      %s166 = scalar_select %p165, %s164, 255
      %s167 = smul.addr %s166, 2
      %s168 = smul.addr %s167, 4
      %s169 = scalar_lea.vmem %s0, %s168
      %s170 = smul.u32 64, %s14
      %s171 = smul.u32 64, %s14
      %p172 = scmp.lt.s32.totalorder %s171, 255
      %s173 = scalar_select %p172, %s171, 255
      %s174 = smul.addr %s173, 8
      %s175 = scalar_lea.vmem %s3, %s174
      %s176 = smul.u32 64, %s14
      %v178 = vld [vmem:[%s169] sm:$0xff]
      %v179 = vld [vmem:[%s169 + $0x8] sm:$0xff]
      %v180 = vld [vmem:[%s169 + $0x10] sm:$0xff]
      %v181 = vld [vmem:[%s169 + $0x18] sm:$0xff]
      %v182 = vld [vmem:[%s169 + $0x20] sm:$0xff]
      %v183 = vld [vmem:[%s169 + $0x28] sm:$0xff]
      %v184 = vld [vmem:[%s169 + $0x30] sm:$0xff]
      %v185 = vld [vmem:[%s169 + $0x38] sm:$0xff]
      %v186 = vld [vmem:[%s169 + $0x40] sm:$0xff]
      %v187 = vld [vmem:[%s169 + $0x48] sm:$0xff]
      %v188 = vld [vmem:[%s169 + $0x50] sm:$0xff]
      %v189 = vld [vmem:[%s169 + $0x58] sm:$0xff]
      %v190 = vld [vmem:[%s169 + $0x60] sm:$0xff]
      %v191 = vld [vmem:[%s169 + $0x68] sm:$0xff]
      %v192 = vld [vmem:[%s169 + $0x70] sm:$0xff]
      %v193 = vld [vmem:[%s169 + $0x78] sm:$0xff]
      %v194 = vld [vmem:[%s169 + $0x80] sm:$0xff]
      %v195 = vld [vmem:[%s169 + $0x88] sm:$0xff]
      %v196 = vld [vmem:[%s169 + $0x90] sm:$0xff]
      %v197 = vld [vmem:[%s169 + $0x98] sm:$0xff]
      %v198 = vld [vmem:[%s169 + $0xa0] sm:$0xff]
      %v199 = vld [vmem:[%s169 + $0xa8] sm:$0xff]
      %v200 = vld [vmem:[%s169 + $0xb0] sm:$0xff]
      %v201 = vld [vmem:[%s169 + $0xb8] sm:$0xff]
      %v202 = vld [vmem:[%s169 + $0xc0] sm:$0xff]
      %v203 = vld [vmem:[%s169 + $0xc8] sm:$0xff]
      %v204 = vld [vmem:[%s169 + $0xd0] sm:$0xff]
      %v205 = vld [vmem:[%s169 + $0xd8] sm:$0xff]
      %v206 = vld [vmem:[%s169 + $0xe0] sm:$0xff]
      %v207 = vld [vmem:[%s169 + $0xe8] sm:$0xff]
      %v208 = vld [vmem:[%s169 + $0xf0] sm:$0xff]
      %v209 = vld [vmem:[%s169 + $0xf8] sm:$0xff]
      %v210 = vld [vmem:[%s169 + $0x100] sm:$0xff]
      %v211 = vld [vmem:[%s169 + $0x108] sm:$0xff]
      %v212 = vld [vmem:[%s169 + $0x110] sm:$0xff]
      %v213 = vld [vmem:[%s169 + $0x118] sm:$0xff]
      %v214 = vld [vmem:[%s169 + $0x120] sm:$0xff]
      %v215 = vld [vmem:[%s169 + $0x128] sm:$0xff]
      %v216 = vld [vmem:[%s169 + $0x130] sm:$0xff]
      %v217 = vld [vmem:[%s169 + $0x138] sm:$0xff]
      %v218 = vld [vmem:[%s169 + $0x140] sm:$0xff]
      %v219 = vld [vmem:[%s169 + $0x148] sm:$0xff]
      %v220 = vld [vmem:[%s169 + $0x150] sm:$0xff]
      %v221 = vld [vmem:[%s169 + $0x158] sm:$0xff]
      %v222 = vld [vmem:[%s169 + $0x160] sm:$0xff]
      %v223 = vld [vmem:[%s169 + $0x168] sm:$0xff]
      %v224 = vld [vmem:[%s169 + $0x170] sm:$0xff]
      %v225 = vld [vmem:[%s169 + $0x178] sm:$0xff]
      %v226 = vld [vmem:[%s169 + $0x180] sm:$0xff]
      %v227 = vld [vmem:[%s169 + $0x188] sm:$0xff]
      %v228 = vld [vmem:[%s169 + $0x190] sm:$0xff]
      %v229 = vld [vmem:[%s169 + $0x198] sm:$0xff]
      %v230 = vld [vmem:[%s169 + $0x1a0] sm:$0xff]
      %v231 = vld [vmem:[%s169 + $0x1a8] sm:$0xff]
      %v232 = vld [vmem:[%s169 + $0x1b0] sm:$0xff]
      %v233 = vld [vmem:[%s169 + $0x1b8] sm:$0xff]
      %v234 = vld [vmem:[%s169 + $0x1c0] sm:$0xff]
      %v235 = vld [vmem:[%s169 + $0x1c8] sm:$0xff]
      %v236 = vld [vmem:[%s169 + $0x1d0] sm:$0xff]
      %v237 = vld [vmem:[%s169 + $0x1d8] sm:$0xff]
      %v238 = vld [vmem:[%s169 + $0x1e0] sm:$0xff]
      %v239 = vld [vmem:[%s169 + $0x1e8] sm:$0xff]
      %v240 = vld [vmem:[%s169 + $0x1f0] sm:$0xff]
      %v241 = vld [vmem:[%s169 + $0x1f8] sm:$0xff]
      %v242 = vld [vmem:[%s1] sm:$0xf]
      %v243 = vld [vmem:[%s1 + $0x4] sm:$0xf]
      %v244 = vld [vmem:[%s1 + $0x8] sm:$0xf]
      %v245 = vld [vmem:[%s1 + $0xc] sm:$0xf]
      %v246 = vld [vmem:[%s1 + $0x10] sm:$0xf]
      %v247 = vld [vmem:[%s1 + $0x14] sm:$0xf]
      %v248 = vld [vmem:[%s1 + $0x18] sm:$0xf]
      %v249 = vld [vmem:[%s1 + $0x1c] sm:$0xf]
      %v250 = vld [vmem:[%s1 + $0x20] sm:$0xf]
      %v251 = vld [vmem:[%s1 + $0x24] sm:$0xf]
      %v252 = vld [vmem:[%s1 + $0x28] sm:$0xf]
      %v253 = vld [vmem:[%s1 + $0x2c] sm:$0xf]
      %v254 = vld [vmem:[%s1 + $0x30] sm:$0xf]
      %v255 = vld [vmem:[%s1 + $0x34] sm:$0xf]
      %v256 = vld [vmem:[%s1 + $0x38] sm:$0xf]
      %v257 = vld [vmem:[%s1 + $0x3c] sm:$0xf]
      %v258 = vld [vmem:[%s1 + $0x40] sm:$0xf]
      %v259 = vld [vmem:[%s1 + $0x44] sm:$0xf]
      %v260 = vld [vmem:[%s1 + $0x48] sm:$0x3]
      %v261 = vld [vmem:[%s2] sm:$0x1]
      %v263 = vlaneseq
      %v264 = vshrl.u32 %v263, 7
      %v265 = vsub.s32 0, %v264
      %v266 = vrot.slane %v261, %v265
      %v332 = vunpack.c.l.b16 %v178
      %v333 = vunpack.c.h.b16 %v178
      %v334 = vunpack.c.l.b16 %v179
      %v335 = vunpack.c.h.b16 %v179
      %v336 = vunpack.c.l.b16 %v180
      %v337 = vunpack.c.h.b16 %v180
      %v338 = vunpack.c.l.b16 %v181
      %v339 = vunpack.c.h.b16 %v181
      %v340 = vunpack.c.l.b16 %v182
      %v341 = vunpack.c.h.b16 %v182
      %v342 = vunpack.c.l.b16 %v183
      %v343 = vunpack.c.h.b16 %v183
      %v344 = vunpack.c.l.b16 %v184
      %v345 = vunpack.c.h.b16 %v184
      %v346 = vunpack.c.l.b16 %v185
      %v347 = vunpack.c.h.b16 %v185
      %v348 = vunpack.c.l.b16 %v186
      %v349 = vunpack.c.h.b16 %v186
      %v350 = vunpack.c.l.b16 %v187
      %v351 = vunpack.c.h.b16 %v187
      %v352 = vunpack.c.l.b16 %v188
      %v353 = vunpack.c.h.b16 %v188
      %v354 = vunpack.c.l.b16 %v189
      %v355 = vunpack.c.h.b16 %v189
      %v356 = vunpack.c.l.b16 %v190
      %v357 = vunpack.c.h.b16 %v190
      %v358 = vunpack.c.l.b16 %v191
      %v359 = vunpack.c.h.b16 %v191
      %v360 = vunpack.c.l.b16 %v192
      %v361 = vunpack.c.h.b16 %v192
      %v362 = vunpack.c.l.b16 %v193
      %v363 = vunpack.c.h.b16 %v193
      %v364 = vunpack.c.l.b16 %v194
      %v365 = vunpack.c.h.b16 %v194
      %v366 = vunpack.c.l.b16 %v195
      %v367 = vunpack.c.h.b16 %v195
      %v368 = vunpack.c.l.b16 %v196
      %v369 = vunpack.c.h.b16 %v196
      %v370 = vunpack.c.l.b16 %v197
      %v371 = vunpack.c.h.b16 %v197
      %v372 = vunpack.c.l.b16 %v198
      %v373 = vunpack.c.h.b16 %v198
      %v374 = vunpack.c.l.b16 %v199
      %v375 = vunpack.c.h.b16 %v199
      %v376 = vunpack.c.l.b16 %v200
      %v377 = vunpack.c.h.b16 %v200
      %v378 = vunpack.c.l.b16 %v201
      %v379 = vunpack.c.h.b16 %v201
      %v380 = vunpack.c.l.b16 %v202
      %v381 = vunpack.c.h.b16 %v202
      %v382 = vunpack.c.l.b16 %v203
      %v383 = vunpack.c.h.b16 %v203
      %v384 = vunpack.c.l.b16 %v204
      %v385 = vunpack.c.h.b16 %v204
      %v386 = vunpack.c.l.b16 %v205
      %v387 = vunpack.c.h.b16 %v205
      %v388 = vunpack.c.l.b16 %v206
      %v389 = vunpack.c.h.b16 %v206
      %v390 = vunpack.c.l.b16 %v207
      %v391 = vunpack.c.h.b16 %v207
      %v392 = vunpack.c.l.b16 %v208
      %v393 = vunpack.c.h.b16 %v208
      %v394 = vunpack.c.l.b16 %v209
      %v395 = vunpack.c.h.b16 %v209
      %v396 = vunpack.c.l.b16 %v210
      %v397 = vunpack.c.h.b16 %v210
      %v398 = vunpack.c.l.b16 %v211
      %v399 = vunpack.c.h.b16 %v211
      %v400 = vunpack.c.l.b16 %v212
      %v401 = vunpack.c.h.b16 %v212
      %v402 = vunpack.c.l.b16 %v213
      %v403 = vunpack.c.h.b16 %v213
      %v404 = vunpack.c.l.b16 %v214
      %v405 = vunpack.c.h.b16 %v214
      %v406 = vunpack.c.l.b16 %v215
      %v407 = vunpack.c.h.b16 %v215
      %v408 = vunpack.c.l.b16 %v216
      %v409 = vunpack.c.h.b16 %v216
      %v410 = vunpack.c.l.b16 %v217
      %v411 = vunpack.c.h.b16 %v217
      %v412 = vunpack.c.l.b16 %v218
      %v413 = vunpack.c.h.b16 %v218
      %v414 = vunpack.c.l.b16 %v219
      %v415 = vunpack.c.h.b16 %v219
      %v416 = vunpack.c.l.b16 %v220
      %v417 = vunpack.c.h.b16 %v220
      %v418 = vunpack.c.l.b16 %v221
      %v419 = vunpack.c.h.b16 %v221
      %v420 = vunpack.c.l.b16 %v222
      %v421 = vunpack.c.h.b16 %v222
      %v422 = vunpack.c.l.b16 %v223
      %v423 = vunpack.c.h.b16 %v223
      %v424 = vunpack.c.l.b16 %v224
      %v425 = vunpack.c.h.b16 %v224
      %v426 = vunpack.c.l.b16 %v225
      %v427 = vunpack.c.h.b16 %v225
      %v428 = vunpack.c.l.b16 %v226
      %v429 = vunpack.c.h.b16 %v226
      %v430 = vunpack.c.l.b16 %v227
      %v431 = vunpack.c.h.b16 %v227
      %v432 = vunpack.c.l.b16 %v228
      %v433 = vunpack.c.h.b16 %v228
      %v434 = vunpack.c.l.b16 %v229
      %v435 = vunpack.c.h.b16 %v229
      %v436 = vunpack.c.l.b16 %v230
      %v437 = vunpack.c.h.b16 %v230
      %v438 = vunpack.c.l.b16 %v231
      %v439 = vunpack.c.h.b16 %v231
      %v440 = vunpack.c.l.b16 %v232
      %v441 = vunpack.c.h.b16 %v232
      %v442 = vunpack.c.l.b16 %v233
      %v443 = vunpack.c.h.b16 %v233
      %v444 = vunpack.c.l.b16 %v234
      %v445 = vunpack.c.h.b16 %v234
      %v446 = vunpack.c.l.b16 %v235
      %v447 = vunpack.c.h.b16 %v235
      %v448 = vunpack.c.l.b16 %v236
      %v449 = vunpack.c.h.b16 %v236
      %v450 = vunpack.c.l.b16 %v237
      %v451 = vunpack.c.h.b16 %v237
      %v452 = vunpack.c.l.b16 %v238
      %v453 = vunpack.c.h.b16 %v238
      %v454 = vunpack.c.l.b16 %v239
      %v455 = vunpack.c.h.b16 %v239
      %v456 = vunpack.c.l.b16 %v240
      %v457 = vunpack.c.h.b16 %v240
      %v458 = vunpack.c.l.b16 %v241
      %v459 = vunpack.c.h.b16 %v241
      %v460 = vpack.c.b16 %v334, %v332
      %v461 = vpack.c.b16 %v335, %v333
      %v462 = vpack.c.b16 %v338, %v336
      %v463 = vpack.c.b16 %v339, %v337
      %v464 = vpack.c.b16 %v342, %v340
      %v465 = vpack.c.b16 %v343, %v341
      %v466 = vpack.c.b16 %v346, %v344
      %v467 = vpack.c.b16 %v347, %v345
      %v468 = vpack.c.b16 %v350, %v348
      %v469 = vpack.c.b16 %v351, %v349
      %v470 = vpack.c.b16 %v354, %v352
      %v471 = vpack.c.b16 %v355, %v353
      %v472 = vpack.c.b16 %v358, %v356
      %v473 = vpack.c.b16 %v359, %v357
      %v474 = vpack.c.b16 %v362, %v360
      %v475 = vpack.c.b16 %v363, %v361
      %v476 = vpack.c.b16 %v366, %v364
      %v477 = vpack.c.b16 %v367, %v365
      %v478 = vpack.c.b16 %v370, %v368
      %v479 = vpack.c.b16 %v371, %v369
      %v480 = vpack.c.b16 %v374, %v372
      %v481 = vpack.c.b16 %v375, %v373
      %v482 = vpack.c.b16 %v378, %v376
      %v483 = vpack.c.b16 %v379, %v377
      %v484 = vpack.c.b16 %v382, %v380
      %v485 = vpack.c.b16 %v383, %v381
      %v486 = vpack.c.b16 %v386, %v384
      %v487 = vpack.c.b16 %v387, %v385
      %v488 = vpack.c.b16 %v390, %v388
      %v489 = vpack.c.b16 %v391, %v389
      %v490 = vpack.c.b16 %v394, %v392
      %v491 = vpack.c.b16 %v395, %v393
      %v492 = vpack.c.b16 %v398, %v396
      %v493 = vpack.c.b16 %v399, %v397
      %v494 = vpack.c.b16 %v402, %v400
      %v495 = vpack.c.b16 %v403, %v401
      %v496 = vpack.c.b16 %v406, %v404
      %v497 = vpack.c.b16 %v407, %v405
      %v498 = vpack.c.b16 %v410, %v408
      %v499 = vpack.c.b16 %v411, %v409
      %v500 = vpack.c.b16 %v414, %v412
      %v501 = vpack.c.b16 %v415, %v413
      %v502 = vpack.c.b16 %v418, %v416
      %v503 = vpack.c.b16 %v419, %v417
      %v504 = vpack.c.b16 %v422, %v420
      %v505 = vpack.c.b16 %v423, %v421
      %v506 = vpack.c.b16 %v426, %v424
      %v507 = vpack.c.b16 %v427, %v425
      %v508 = vpack.c.b16 %v430, %v428
      %v509 = vpack.c.b16 %v431, %v429
      %v510 = vpack.c.b16 %v434, %v432
      %v511 = vpack.c.b16 %v435, %v433
      %v512 = vpack.c.b16 %v438, %v436
      %v513 = vpack.c.b16 %v439, %v437
      %v514 = vpack.c.b16 %v442, %v440
      %v515 = vpack.c.b16 %v443, %v441
      %v516 = vpack.c.b16 %v446, %v444
      %v517 = vpack.c.b16 %v447, %v445
      %v518 = vpack.c.b16 %v450, %v448
      %v519 = vpack.c.b16 %v451, %v449
      %v520 = vpack.c.b16 %v454, %v452
      %v521 = vpack.c.b16 %v455, %v453
      %v522 = vpack.c.b16 %v458, %v456
      %v523 = vpack.c.b16 %v459, %v457
      %v575 = vunpack.c.l.b16 %v242
      %v576 = vunpack.c.l.b16 %v243
      %v577 = vunpack.c.l.b16 %v244
      %v578 = vunpack.c.l.b16 %v245
      %v579 = vunpack.c.l.b16 %v246
      %v580 = vunpack.c.l.b16 %v247
      %v581 = vunpack.c.l.b16 %v248
      %v582 = vunpack.c.l.b16 %v249
      %v583 = vunpack.c.l.b16 %v250
      %v584 = vunpack.c.l.b16 %v251
      %v585 = vunpack.c.l.b16 %v252
      %v586 = vunpack.c.l.b16 %v253
      %v587 = vunpack.c.l.b16 %v254
      %v588 = vunpack.c.l.b16 %v255
      %v589 = vunpack.c.l.b16 %v256
      %v590 = vunpack.c.l.b16 %v257
      %v591 = vunpack.c.l.b16 %v258
      %v592 = vunpack.c.l.b16 %v259
      %v593 = vunpack.c.l.b16 %v260
      %v594 = vpack.c.b16 %v576, %v575
      %v595 = vpack.c.b16 %v578, %v577
      %v596 = vpack.c.b16 %v580, %v579
      %v597 = vpack.c.b16 %v582, %v581
      %v598 = vpack.c.b16 %v584, %v583
      %v599 = vpack.c.b16 %v586, %v585
      %v600 = vpack.c.b16 %v588, %v587
      %v601 = vpack.c.b16 %v590, %v589
      %v602 = vpack.c.b16 %v592, %v591
      %v603 = vpack.c.b16 %v593, %v593
      %vm613 = vcmask 154624
      %v615 = vsel %vm613, %v461, 0
      %v618 = vsel %vm613, %v463, 0
      %v621 = vsel %vm613, %v465, 0
      %v624 = vsel %vm613, %v467, 0
      %v627 = vsel %vm613, %v469, 0
      %v630 = vsel %vm613, %v471, 0
      %v633 = vsel %vm613, %v473, 0
      %v636 = vsel %vm613, %v475, 0
      %v639 = vsel %vm613, %v477, 0
      %v642 = vsel %vm613, %v479, 0
      %v645 = vsel %vm613, %v481, 0
      %v648 = vsel %vm613, %v483, 0
      %v651 = vsel %vm613, %v485, 0
      %v654 = vsel %vm613, %v487, 0
      %v657 = vsel %vm613, %v489, 0
      %v660 = vsel %vm613, %v491, 0
      %v663 = vsel %vm613, %v493, 0
      %v666 = vsel %vm613, %v495, 0
      %v669 = vsel %vm613, %v497, 0
      %v672 = vsel %vm613, %v499, 0
      %v675 = vsel %vm613, %v501, 0
      %v678 = vsel %vm613, %v503, 0
      %v681 = vsel %vm613, %v505, 0
      %v684 = vsel %vm613, %v507, 0
      %v687 = vsel %vm613, %v509, 0
      %v690 = vsel %vm613, %v511, 0
      %v693 = vsel %vm613, %v513, 0
      %v696 = vsel %vm613, %v515, 0
      %v699 = vsel %vm613, %v517, 0
      %v702 = vsel %vm613, %v519, 0
      %v705 = vsel %vm613, %v521, 0
      %v708 = vsel %vm613, %v523, 0
      %vm710 = vcmask 1040384
      %vm711 = vcmask 1041408
      %v712 = vsel %vm710, 4294967295, 65535
      %v713 = vsel %vm711, %v712, 0
      %v715 = vand.u32 %v603, %v713
      %717 = vmatprep.subr.bf16.mxu0 0
      %718 = vmatpush1.bf16.msra.mxu0 %v601
      %719 = vmatprep.subr.bf16.mxu0 0
      %720 = vmatpush1.bf16.msra.mxu0 %v600
      %721 = vmatprep.subr.bf16.mxu0 0
      %722 = vmatpush1.bf16.msra.mxu0 %v599
      %723 = vmatprep.subr.bf16.mxu0 0
      %724 = vmatpush1.bf16.msra.mxu0 %v598
      %725 = vmatprep.subr.bf16.mxu0 0
      %726 = vmatpush1.bf16.msra.mxu0 %v597
      %727 = vmatprep.subr.bf16.mxu0 0
      %728 = vmatpush1.bf16.msra.mxu0 %v596
      %729 = vmatprep.subr.bf16.mxu0 0
      %730 = vmatpush1.bf16.msra.mxu0 %v595
      %731 = vmatprep.subr.bf16.mxu0 0
      %732 = vmatpush1.bf16.msra.mxu0 %v594
      %733 = vmatprep.subr.bf16.mxu0 0
      %734 = vmatpush2.bf16.msra.mxu0 0
      %735 = vmatprep.subr.bf16.mxu0 0
      %736 = vmatpush2.bf16.msra.mxu0 0
      %737 = vmatprep.subr.bf16.mxu0 0
      %738 = vmatpush2.bf16.msra.mxu0 0
      %739 = vmatprep.subr.bf16.mxu0 0
      %740 = vmatpush2.bf16.msra.mxu0 0
      %741 = vmatprep.subr.bf16.mxu0 0
      %742 = vmatpush2.bf16.msra.mxu0 0
      %743 = vmatprep.subr.bf16.mxu0 0
      %744 = vmatpush2.bf16.msra.mxu0 0
      %745 = vmatprep.subr.bf16.mxu0 0
      %746 = vmatpush2.bf16.msra.mxu0 %v715
      %747 = vmatprep.subr.bf16.mxu0 0
      %748 = vmatpush2.bf16.msra.mxu0 %v602
      %749 = vmatprep.mubr.bf16.mxu0 %v615
      %750 = vmatmul.mubr.bf16.gmra.mxu0 %v460
      %v751 = vpop.f32.mrf.mxu0
      %v752 = vadd.f32 %v266, %v751
      %v753 = vpop.f32.mrf.mxu0
      %v754 = vpop.f32.mrf.mxu0
      %v755 = vadd.f32 %v266, %v754
      %v756 = vpop.f32.mrf.mxu0
      %757 = vmatprep.mubr.bf16.mxu0 %v618
      %758 = vmatmul.mubr.bf16.gmra.mxu0 %v462
      %v759 = vpop.f32.mrf.mxu0
      %v760 = vadd.f32 %v266, %v759
      %v761 = vpop.f32.mrf.mxu0
      %v762 = vpop.f32.mrf.mxu0
      %v763 = vadd.f32 %v266, %v762
      %v764 = vpop.f32.mrf.mxu0
      %765 = vmatprep.mubr.bf16.mxu0 %v621
      %766 = vmatmul.mubr.bf16.gmra.mxu0 %v464
      %v767 = vpop.f32.mrf.mxu0
      %v768 = vadd.f32 %v266, %v767
      %v769 = vpop.f32.mrf.mxu0
      %v770 = vpop.f32.mrf.mxu0
      %v771 = vadd.f32 %v266, %v770
      %v772 = vpop.f32.mrf.mxu0
      %773 = vmatprep.mubr.bf16.mxu0 %v624
      %774 = vmatmul.mubr.bf16.gmra.mxu0 %v466
      %v775 = vpop.f32.mrf.mxu0
      %v776 = vadd.f32 %v266, %v775
      %v777 = vpop.f32.mrf.mxu0
      %v778 = vpop.f32.mrf.mxu0
      %v779 = vadd.f32 %v266, %v778
      %v780 = vpop.f32.mrf.mxu0
      %781 = vmatprep.mubr.bf16.mxu0 %v627
      %782 = vmatmul.mubr.bf16.gmra.mxu0 %v468
      %v783 = vpop.f32.mrf.mxu0
      %v784 = vadd.f32 %v266, %v783
      %v785 = vpop.f32.mrf.mxu0
      %v786 = vpop.f32.mrf.mxu0
      %v787 = vadd.f32 %v266, %v786
      %v788 = vpop.f32.mrf.mxu0
      %789 = vmatprep.mubr.bf16.mxu0 %v630
      %790 = vmatmul.mubr.bf16.gmra.mxu0 %v470
      %v791 = vpop.f32.mrf.mxu0
      %v792 = vadd.f32 %v266, %v791
      %v793 = vpop.f32.mrf.mxu0
      %v794 = vpop.f32.mrf.mxu0
      %v795 = vadd.f32 %v266, %v794
      %v796 = vpop.f32.mrf.mxu0
      %797 = vmatprep.mubr.bf16.mxu0 %v633
      %798 = vmatmul.mubr.bf16.gmra.mxu0 %v472
      %v799 = vpop.f32.mrf.mxu0
      %v800 = vadd.f32 %v266, %v799
      %v801 = vpop.f32.mrf.mxu0
      %v802 = vpop.f32.mrf.mxu0
      %v803 = vadd.f32 %v266, %v802
      %v804 = vpop.f32.mrf.mxu0
      %805 = vmatprep.mubr.bf16.mxu0 %v636
      %806 = vmatmul.mubr.bf16.gmra.mxu0 %v474
      %v807 = vpop.f32.mrf.mxu0
      %v808 = vadd.f32 %v266, %v807
      %v809 = vpop.f32.mrf.mxu0
      %v810 = vpop.f32.mrf.mxu0
      %v811 = vadd.f32 %v266, %v810
      %v812 = vpop.f32.mrf.mxu0
      %813 = vmatprep.mubr.bf16.mxu0 %v639
      %814 = vmatmul.mubr.bf16.gmra.mxu0 %v476
      %v815 = vpop.f32.mrf.mxu0
      %v816 = vadd.f32 %v266, %v815
      %v817 = vpop.f32.mrf.mxu0
      %v818 = vpop.f32.mrf.mxu0
      %v819 = vadd.f32 %v266, %v818
      %v820 = vpop.f32.mrf.mxu0
      %821 = vmatprep.mubr.bf16.mxu0 %v642
      %822 = vmatmul.mubr.bf16.gmra.mxu0 %v478
      %v823 = vpop.f32.mrf.mxu0
      %v824 = vadd.f32 %v266, %v823
      %v825 = vpop.f32.mrf.mxu0
      %v826 = vpop.f32.mrf.mxu0
      %v827 = vadd.f32 %v266, %v826
      %v828 = vpop.f32.mrf.mxu0
      %829 = vmatprep.mubr.bf16.mxu0 %v645
      %830 = vmatmul.mubr.bf16.gmra.mxu0 %v480
      %v831 = vpop.f32.mrf.mxu0
      %v832 = vadd.f32 %v266, %v831
      %v833 = vpop.f32.mrf.mxu0
      %v834 = vpop.f32.mrf.mxu0
      %v835 = vadd.f32 %v266, %v834
      %v836 = vpop.f32.mrf.mxu0
      %837 = vmatprep.mubr.bf16.mxu0 %v648
      %838 = vmatmul.mubr.bf16.gmra.mxu0 %v482
      %v839 = vpop.f32.mrf.mxu0
      %v840 = vadd.f32 %v266, %v839
      %v841 = vpop.f32.mrf.mxu0
      %v842 = vpop.f32.mrf.mxu0
      %v843 = vadd.f32 %v266, %v842
      %v844 = vpop.f32.mrf.mxu0
      %845 = vmatprep.mubr.bf16.mxu0 %v651
      %846 = vmatmul.mubr.bf16.gmra.mxu0 %v484
      %v847 = vpop.f32.mrf.mxu0
      %v848 = vadd.f32 %v266, %v847
      %v849 = vpop.f32.mrf.mxu0
      %v850 = vpop.f32.mrf.mxu0
      %v851 = vadd.f32 %v266, %v850
      %v852 = vpop.f32.mrf.mxu0
      %853 = vmatprep.mubr.bf16.mxu0 %v654
      %854 = vmatmul.mubr.bf16.gmra.mxu0 %v486
      %v855 = vpop.f32.mrf.mxu0
      %v856 = vadd.f32 %v266, %v855
      %v857 = vpop.f32.mrf.mxu0
      %v858 = vpop.f32.mrf.mxu0
      %v859 = vadd.f32 %v266, %v858
      %v860 = vpop.f32.mrf.mxu0
      %861 = vmatprep.mubr.bf16.mxu0 %v657
      %862 = vmatmul.mubr.bf16.gmra.mxu0 %v488
      %v863 = vpop.f32.mrf.mxu0
      %v864 = vadd.f32 %v266, %v863
      %v865 = vpop.f32.mrf.mxu0
      %v866 = vpop.f32.mrf.mxu0
      %v867 = vadd.f32 %v266, %v866
      %v868 = vpop.f32.mrf.mxu0
      %869 = vmatprep.mubr.bf16.mxu0 %v660
      %870 = vmatmul.mubr.bf16.gmra.mxu0 %v490
      %v871 = vpop.f32.mrf.mxu0
      %v872 = vadd.f32 %v266, %v871
      %v873 = vpop.f32.mrf.mxu0
      %v874 = vpop.f32.mrf.mxu0
      %v875 = vadd.f32 %v266, %v874
      %v876 = vpop.f32.mrf.mxu0
      %877 = vmatprep.mubr.bf16.mxu0 %v663
      %878 = vmatmul.mubr.bf16.gmra.mxu0 %v492
      %v879 = vpop.f32.mrf.mxu0
      %v880 = vadd.f32 %v266, %v879
      %v881 = vpop.f32.mrf.mxu0
      %v882 = vpop.f32.mrf.mxu0
      %v883 = vadd.f32 %v266, %v882
      %v884 = vpop.f32.mrf.mxu0
      %885 = vmatprep.mubr.bf16.mxu0 %v666
      %886 = vmatmul.mubr.bf16.gmra.mxu0 %v494
      %v887 = vpop.f32.mrf.mxu0
      %v888 = vadd.f32 %v266, %v887
      %v889 = vpop.f32.mrf.mxu0
      %v890 = vpop.f32.mrf.mxu0
      %v891 = vadd.f32 %v266, %v890
      %v892 = vpop.f32.mrf.mxu0
      %893 = vmatprep.mubr.bf16.mxu0 %v669
      %894 = vmatmul.mubr.bf16.gmra.mxu0 %v496
      %v895 = vpop.f32.mrf.mxu0
      %v896 = vadd.f32 %v266, %v895
      %v897 = vpop.f32.mrf.mxu0
      %v898 = vpop.f32.mrf.mxu0
      %v899 = vadd.f32 %v266, %v898
      %v900 = vpop.f32.mrf.mxu0
      %901 = vmatprep.mubr.bf16.mxu0 %v672
      %902 = vmatmul.mubr.bf16.gmra.mxu0 %v498
      %v903 = vpop.f32.mrf.mxu0
      %v904 = vadd.f32 %v266, %v903
      %v905 = vpop.f32.mrf.mxu0
      %v906 = vpop.f32.mrf.mxu0
      %v907 = vadd.f32 %v266, %v906
      %v908 = vpop.f32.mrf.mxu0
      %909 = vmatprep.mubr.bf16.mxu0 %v675
      %910 = vmatmul.mubr.bf16.gmra.mxu0 %v500
      %v911 = vpop.f32.mrf.mxu0
      %v912 = vadd.f32 %v266, %v911
      %v913 = vpop.f32.mrf.mxu0
      %v914 = vpop.f32.mrf.mxu0
      %v915 = vadd.f32 %v266, %v914
      %v916 = vpop.f32.mrf.mxu0
      %917 = vmatprep.mubr.bf16.mxu0 %v678
      %918 = vmatmul.mubr.bf16.gmra.mxu0 %v502
      %v919 = vpop.f32.mrf.mxu0
      %v920 = vadd.f32 %v266, %v919
      %v921 = vpop.f32.mrf.mxu0
      %v922 = vpop.f32.mrf.mxu0
      %v923 = vadd.f32 %v266, %v922
      %v924 = vpop.f32.mrf.mxu0
      %925 = vmatprep.mubr.bf16.mxu0 %v681
      %926 = vmatmul.mubr.bf16.gmra.mxu0 %v504
      %v927 = vpop.f32.mrf.mxu0
      %v928 = vadd.f32 %v266, %v927
      %v929 = vpop.f32.mrf.mxu0
      %v930 = vpop.f32.mrf.mxu0
      %v931 = vadd.f32 %v266, %v930
      %v932 = vpop.f32.mrf.mxu0
      %933 = vmatprep.mubr.bf16.mxu0 %v684
      %934 = vmatmul.mubr.bf16.gmra.mxu0 %v506
      %v935 = vpop.f32.mrf.mxu0
      %v936 = vadd.f32 %v266, %v935
      %v937 = vpop.f32.mrf.mxu0
      %v938 = vpop.f32.mrf.mxu0
      %v939 = vadd.f32 %v266, %v938
      %v940 = vpop.f32.mrf.mxu0
      %941 = vmatprep.mubr.bf16.mxu0 %v687
      %942 = vmatmul.mubr.bf16.gmra.mxu0 %v508
      %v943 = vpop.f32.mrf.mxu0
      %v944 = vadd.f32 %v266, %v943
      %v945 = vpop.f32.mrf.mxu0
      %v946 = vpop.f32.mrf.mxu0
      %v947 = vadd.f32 %v266, %v946
      %v948 = vpop.f32.mrf.mxu0
      %949 = vmatprep.mubr.bf16.mxu0 %v690
      %950 = vmatmul.mubr.bf16.gmra.mxu0 %v510
      %v951 = vpop.f32.mrf.mxu0
      %v952 = vadd.f32 %v266, %v951
      %v953 = vpop.f32.mrf.mxu0
      %v954 = vpop.f32.mrf.mxu0
      %v955 = vadd.f32 %v266, %v954
      %v956 = vpop.f32.mrf.mxu0
      %957 = vmatprep.mubr.bf16.mxu0 %v693
      %958 = vmatmul.mubr.bf16.gmra.mxu0 %v512
      %v959 = vpop.f32.mrf.mxu0
      %v960 = vadd.f32 %v266, %v959
      %v961 = vpop.f32.mrf.mxu0
      %v962 = vpop.f32.mrf.mxu0
      %v963 = vadd.f32 %v266, %v962
      %v964 = vpop.f32.mrf.mxu0
      %965 = vmatprep.mubr.bf16.mxu0 %v696
      %966 = vmatmul.mubr.bf16.gmra.mxu0 %v514
      %v967 = vpop.f32.mrf.mxu0
      %v968 = vadd.f32 %v266, %v967
      %v969 = vpop.f32.mrf.mxu0
      %v970 = vpop.f32.mrf.mxu0
      %v971 = vadd.f32 %v266, %v970
      %v972 = vpop.f32.mrf.mxu0
      %973 = vmatprep.mubr.bf16.mxu0 %v699
      %974 = vmatmul.mubr.bf16.gmra.mxu0 %v516
      %v975 = vpop.f32.mrf.mxu0
      %v976 = vadd.f32 %v266, %v975
      %v977 = vpop.f32.mrf.mxu0
      %v978 = vpop.f32.mrf.mxu0
      %v979 = vadd.f32 %v266, %v978
      %v980 = vpop.f32.mrf.mxu0
      %981 = vmatprep.mubr.bf16.mxu0 %v702
      %982 = vmatmul.mubr.bf16.gmra.mxu0 %v518
      %v983 = vpop.f32.mrf.mxu0
      %v984 = vadd.f32 %v266, %v983
      %v985 = vpop.f32.mrf.mxu0
      %v986 = vpop.f32.mrf.mxu0
      %v987 = vadd.f32 %v266, %v986
      %v988 = vpop.f32.mrf.mxu0
      %989 = vmatprep.mubr.bf16.mxu0 %v705
      %990 = vmatmul.mubr.bf16.gmra.mxu0 %v520
      %v991 = vpop.f32.mrf.mxu0
      %v992 = vadd.f32 %v266, %v991
      %v993 = vpop.f32.mrf.mxu0
      %v994 = vpop.f32.mrf.mxu0
      %v995 = vadd.f32 %v266, %v994
      %v996 = vpop.f32.mrf.mxu0
      %997 = vmatprep.mubr.bf16.mxu0 %v708
      %998 = vmatmul.mubr.bf16.gmra.mxu0 %v522
      %v999 = vpop.f32.mrf.mxu0
      %v1000 = vadd.f32 %v266, %v999
      %v1001 = vpop.f32.mrf.mxu0
      %v1002 = vpop.f32.mrf.mxu0
      %v1003 = vadd.f32 %v266, %v1002
      %v1004 = vpop.f32.mrf.mxu0
      %1005 = vdwg.mxu0
      %v1006 = vmax.f32 %v752, 0.0
      %v1007 = vmax.f32 %v755, 0.0
      %v1008 = vmax.f32 %v760, 0.0
      %v1009 = vmax.f32 %v763, 0.0
      %v1010 = vmax.f32 %v768, 0.0
      %v1011 = vmax.f32 %v771, 0.0
      %v1012 = vmax.f32 %v776, 0.0
      %v1013 = vmax.f32 %v779, 0.0
      %v1014 = vmax.f32 %v784, 0.0
      %v1015 = vmax.f32 %v787, 0.0
      %v1016 = vmax.f32 %v792, 0.0
      %v1017 = vmax.f32 %v795, 0.0
      %v1018 = vmax.f32 %v800, 0.0
      %v1019 = vmax.f32 %v803, 0.0
      %v1020 = vmax.f32 %v808, 0.0
      %v1021 = vmax.f32 %v811, 0.0
      %v1022 = vmax.f32 %v816, 0.0
      %v1023 = vmax.f32 %v819, 0.0
      %v1024 = vmax.f32 %v824, 0.0
      %v1025 = vmax.f32 %v827, 0.0
      %v1026 = vmax.f32 %v832, 0.0
      %v1027 = vmax.f32 %v835, 0.0
      %v1028 = vmax.f32 %v840, 0.0
      %v1029 = vmax.f32 %v843, 0.0
      %v1030 = vmax.f32 %v848, 0.0
      %v1031 = vmax.f32 %v851, 0.0
      %v1032 = vmax.f32 %v856, 0.0
      %v1033 = vmax.f32 %v859, 0.0
      %v1034 = vmax.f32 %v864, 0.0
      %v1035 = vmax.f32 %v867, 0.0
      %v1036 = vmax.f32 %v872, 0.0
      %v1037 = vmax.f32 %v875, 0.0
      %v1038 = vmax.f32 %v880, 0.0
      %v1039 = vmax.f32 %v883, 0.0
      %v1040 = vmax.f32 %v888, 0.0
      %v1041 = vmax.f32 %v891, 0.0
      %v1042 = vmax.f32 %v896, 0.0
      %v1043 = vmax.f32 %v899, 0.0
      %v1044 = vmax.f32 %v904, 0.0
      %v1045 = vmax.f32 %v907, 0.0
      %v1046 = vmax.f32 %v912, 0.0
      %v1047 = vmax.f32 %v915, 0.0
      %v1048 = vmax.f32 %v920, 0.0
      %v1049 = vmax.f32 %v923, 0.0
      %v1050 = vmax.f32 %v928, 0.0
      %v1051 = vmax.f32 %v931, 0.0
      %v1052 = vmax.f32 %v936, 0.0
      %v1053 = vmax.f32 %v939, 0.0
      %v1054 = vmax.f32 %v944, 0.0
      %v1055 = vmax.f32 %v947, 0.0
      %v1056 = vmax.f32 %v952, 0.0
      %v1057 = vmax.f32 %v955, 0.0
      %v1058 = vmax.f32 %v960, 0.0
      %v1059 = vmax.f32 %v963, 0.0
      %v1060 = vmax.f32 %v968, 0.0
      %v1061 = vmax.f32 %v971, 0.0
      %v1062 = vmax.f32 %v976, 0.0
      %v1063 = vmax.f32 %v979, 0.0
      %v1064 = vmax.f32 %v984, 0.0
      %v1065 = vmax.f32 %v987, 0.0
      %v1066 = vmax.f32 %v992, 0.0
      %v1067 = vmax.f32 %v995, 0.0
      %v1068 = vmax.f32 %v1000, 0.0
      %v1069 = vmax.f32 %v1003, 0.0
      %vm1070 = vcmask 64512
      %1071 = vst.msk [vmem:[%s175] sm:$0xff] %vm1070, %v1006
      %1072 = vst.msk [vmem:[%s175 + $0x8] sm:$0xff] %vm1070, %v1007
      %1073 = vst.msk [vmem:[%s175 + $0x10] sm:$0xff] %vm1070, %v1008
      %1074 = vst.msk [vmem:[%s175 + $0x18] sm:$0xff] %vm1070, %v1009
      %1075 = vst.msk [vmem:[%s175 + $0x20] sm:$0xff] %vm1070, %v1010
      %1076 = vst.msk [vmem:[%s175 + $0x28] sm:$0xff] %vm1070, %v1011
      %1077 = vst.msk [vmem:[%s175 + $0x30] sm:$0xff] %vm1070, %v1012
      %1078 = vst.msk [vmem:[%s175 + $0x38] sm:$0xff] %vm1070, %v1013
      %1079 = vst.msk [vmem:[%s175 + $0x40] sm:$0xff] %vm1070, %v1014
      %1080 = vst.msk [vmem:[%s175 + $0x48] sm:$0xff] %vm1070, %v1015
      %1081 = vst.msk [vmem:[%s175 + $0x50] sm:$0xff] %vm1070, %v1016
      %1082 = vst.msk [vmem:[%s175 + $0x58] sm:$0xff] %vm1070, %v1017
      %1083 = vst.msk [vmem:[%s175 + $0x60] sm:$0xff] %vm1070, %v1018
      %1084 = vst.msk [vmem:[%s175 + $0x68] sm:$0xff] %vm1070, %v1019
      %1085 = vst.msk [vmem:[%s175 + $0x70] sm:$0xff] %vm1070, %v1020
      %1086 = vst.msk [vmem:[%s175 + $0x78] sm:$0xff] %vm1070, %v1021
      %1087 = vst.msk [vmem:[%s175 + $0x80] sm:$0xff] %vm1070, %v1022
      %1088 = vst.msk [vmem:[%s175 + $0x88] sm:$0xff] %vm1070, %v1023
      %1089 = vst.msk [vmem:[%s175 + $0x90] sm:$0xff] %vm1070, %v1024
      %1090 = vst.msk [vmem:[%s175 + $0x98] sm:$0xff] %vm1070, %v1025
      %1091 = vst.msk [vmem:[%s175 + $0xa0] sm:$0xff] %vm1070, %v1026
      %1092 = vst.msk [vmem:[%s175 + $0xa8] sm:$0xff] %vm1070, %v1027
      %1093 = vst.msk [vmem:[%s175 + $0xb0] sm:$0xff] %vm1070, %v1028
      %1094 = vst.msk [vmem:[%s175 + $0xb8] sm:$0xff] %vm1070, %v1029
      %1095 = vst.msk [vmem:[%s175 + $0xc0] sm:$0xff] %vm1070, %v1030
      %1096 = vst.msk [vmem:[%s175 + $0xc8] sm:$0xff] %vm1070, %v1031
      %1097 = vst.msk [vmem:[%s175 + $0xd0] sm:$0xff] %vm1070, %v1032
      %1098 = vst.msk [vmem:[%s175 + $0xd8] sm:$0xff] %vm1070, %v1033
      %1099 = vst.msk [vmem:[%s175 + $0xe0] sm:$0xff] %vm1070, %v1034
      %1100 = vst.msk [vmem:[%s175 + $0xe8] sm:$0xff] %vm1070, %v1035
      %1101 = vst.msk [vmem:[%s175 + $0xf0] sm:$0xff] %vm1070, %v1036
      %1102 = vst.msk [vmem:[%s175 + $0xf8] sm:$0xff] %vm1070, %v1037
      %1103 = vst.msk [vmem:[%s175 + $0x100] sm:$0xff] %vm1070, %v1038
      %1104 = vst.msk [vmem:[%s175 + $0x108] sm:$0xff] %vm1070, %v1039
      %1105 = vst.msk [vmem:[%s175 + $0x110] sm:$0xff] %vm1070, %v1040
      %1106 = vst.msk [vmem:[%s175 + $0x118] sm:$0xff] %vm1070, %v1041
      %1107 = vst.msk [vmem:[%s175 + $0x120] sm:$0xff] %vm1070, %v1042
      %1108 = vst.msk [vmem:[%s175 + $0x128] sm:$0xff] %vm1070, %v1043
      %1109 = vst.msk [vmem:[%s175 + $0x130] sm:$0xff] %vm1070, %v1044
      %1110 = vst.msk [vmem:[%s175 + $0x138] sm:$0xff] %vm1070, %v1045
      %1111 = vst.msk [vmem:[%s175 + $0x140] sm:$0xff] %vm1070, %v1046
      %1112 = vst.msk [vmem:[%s175 + $0x148] sm:$0xff] %vm1070, %v1047
      %1113 = vst.msk [vmem:[%s175 + $0x150] sm:$0xff] %vm1070, %v1048
      %1114 = vst.msk [vmem:[%s175 + $0x158] sm:$0xff] %vm1070, %v1049
      %1115 = vst.msk [vmem:[%s175 + $0x160] sm:$0xff] %vm1070, %v1050
      %1116 = vst.msk [vmem:[%s175 + $0x168] sm:$0xff] %vm1070, %v1051
      %1117 = vst.msk [vmem:[%s175 + $0x170] sm:$0xff] %vm1070, %v1052
      %1118 = vst.msk [vmem:[%s175 + $0x178] sm:$0xff] %vm1070, %v1053
      %1119 = vst.msk [vmem:[%s175 + $0x180] sm:$0xff] %vm1070, %v1054
      %1120 = vst.msk [vmem:[%s175 + $0x188] sm:$0xff] %vm1070, %v1055
      %1121 = vst.msk [vmem:[%s175 + $0x190] sm:$0xff] %vm1070, %v1056
      %1122 = vst.msk [vmem:[%s175 + $0x198] sm:$0xff] %vm1070, %v1057
      %1123 = vst.msk [vmem:[%s175 + $0x1a0] sm:$0xff] %vm1070, %v1058
      %1124 = vst.msk [vmem:[%s175 + $0x1a8] sm:$0xff] %vm1070, %v1059
      %1125 = vst.msk [vmem:[%s175 + $0x1b0] sm:$0xff] %vm1070, %v1060
      %1126 = vst.msk [vmem:[%s175 + $0x1b8] sm:$0xff] %vm1070, %v1061
      %1127 = vst.msk [vmem:[%s175 + $0x1c0] sm:$0xff] %vm1070, %v1062
      %1128 = vst.msk [vmem:[%s175 + $0x1c8] sm:$0xff] %vm1070, %v1063
      %1129 = vst.msk [vmem:[%s175 + $0x1d0] sm:$0xff] %vm1070, %v1064
      %1130 = vst.msk [vmem:[%s175 + $0x1d8] sm:$0xff] %vm1070, %v1065
      %1131 = vst.msk [vmem:[%s175 + $0x1e0] sm:$0xff] %vm1070, %v1066
      %1132 = vst.msk [vmem:[%s175 + $0x1e8] sm:$0xff] %vm1070, %v1067
      %1133 = vst.msk [vmem:[%s175 + $0x1f0] sm:$0xff] %vm1070, %v1068
      %1134 = vst.msk [vmem:[%s175 + $0x1f8] sm:$0xff] %vm1070, %v1069
      %s1135 = smul.u32 64, %s14
      %p1136 = scmp.lt.s32.totalorder %s1135, 255
      %s1137 = scalar_select %p1136, %s1135, 255
      %s1138 = smul.addr %s1137, 8
      %s1139 = scalar_lea.vmem %s3, %s1138
      // Predicated region
      $region33: #{pallas_matmul_bias.1} parent=31 // pred_check
        %p1140 = pneg %p100
      $region34: #{pallas_matmul_bias.1} parent=31 // pred_check_branch
        %1142 = sbr.rel (%p1140) target = $region36
      $region35: #{pallas_matmul_bias.1} parent=31 // pred_region
        %s1143 = smul.u32 64, %s14
      $region36: #{pallas_matmul_bias.1} parent=31 // pred_fallthru
        _
    $region32: #{pallas_matmul_bias.1} parent=5 // pred_fallthru
      _
    %p1144 = scmp.le.s32.totalorder 2, %s9
    // Predicated region
    $region37: #{pallas_matmul_bias.1} parent=5 // pred_check
      %p1145 = pneg %p1144
    $region38: #{pallas_matmul_bias.1} parent=5 // pred_check_branch
      %1147 = sbr.rel (%p1145) target = $region40
    $region39: #{pallas_matmul_bias.1} parent=5 // pred_region
      %s1148 = ssub.s32 %s9, 2
      // Predicated region
      $region41: #{pallas_matmul_bias.1} parent=39 // pred_check
        %p1149 = pneg %p106
      $region42: #{pallas_matmul_bias.1} parent=39 // pred_check_branch
        %1151 = sbr.rel (%p1149) target = $region44
      $region43: #{pallas_matmul_bias.1} parent=39 // pred_region
        %s1152 = smul.u32 64, %s15
        %p1153 = scmp.lt.s32.totalorder %s1152, 255
        %s1154 = scalar_select %p1153, %s1152, 255
        %s1155 = smul.addr %s1154, 8
        %s1156 = scalar_lea.vmem %s3, %s1155
      $region44: #{pallas_matmul_bias.1} parent=39 // pred_fallthru
        _
    $region40: #{pallas_matmul_bias.1} parent=5 // pred_fallthru
      _
  $region6: #{pallas_matmul_bias.1} parent=0 // loop_footer
    %s13 = sadd.s32 1, %s9
  $region7: #{pallas_matmul_bias.1} parent=0 // loop_footer_branch
    %8 = sbr.rel target = $region3
  $region8: #{pallas_matmul_bias.1} parent=0 // loop_exit
    _

</llo_original>
